<compile_context>
chip_gen: v7x
topology: tpu7x:2x2x1
jax: 0.10.0
libtpu: 0.0.40
codegen_flags: <defaults>
</compile_context>

<pallas_src>
import functools

import jax
import jax.numpy as jnp
from jax.experimental import pallas as pl
from jax.experimental.pallas import tpu as pltpu


def _ceil_div(a, b):
    return -(-a // b)


def _round_up(a, b):
    return _ceil_div(a, b) * b


def _loss_kernel(logits_ref, tgt_ref,
                 ce_out, pt_out, pp_out, tt_out,
                 ce_acc, pt_acc, pp_acc, tt_acc,
                 *, n_classes, approx_recip):
    """Processes one (C, TS, 128) logits tile and one (TS, 128) target tile."""
    j = pl.program_id(2)

    @pl.when(j == 0)
    def _():
        ce_acc[...] = jnp.zeros_like(ce_acc)
        pt_acc[...] = jnp.zeros_like(pt_acc)
        pp_acc[...] = jnp.zeros_like(pp_acc)
        tt_acc[...] = jnp.zeros_like(tt_acc)

    t = tgt_ref[...].astype(jnp.int32)                       # (TS, 128)  .long()
    x = [logits_ref[i].astype(jnp.float32)                   # C x (TS, 128)
         for i in range(n_classes)]

    # Softmax over the class axis == elementwise ops across C packed slabs.
    m = x[0]
    for i in range(1, n_classes):
        m = jnp.maximum(m, x[i])
    e = [jnp.exp(xi - m) for xi in x]
    s = e[0]
    for i in range(1, n_classes):
        s = s + e[i]
    inv_s = pl.reciprocal(s, approx=approx_recip)            # one recip per pixel
    p = [ei * inv_s for ei in e]
    lse = m + jnp.log(s)                                     # logsumexp

    def fold(a):                                             # (TS,128) -> (1,128)
        return jnp.sum(a, axis=0, keepdims=True)

    logit_t = jnp.zeros_like(m)
    for i in range(n_classes):
        oh = (t == i).astype(jnp.float32)                    # one-hot slab
        logit_t = logit_t + x[i] * oh
        pt_acc[i] += fold(p[i] * oh)                         # intersect
        pp_acc[i] += fold(p[i] * p[i])                       # sum p^2 (z_sum)
        tt_acc[i] += fold(oh)                                # sum onehot (== onehot^2)
    ce_acc[...] += fold(lse - logit_t)                       # per-pixel CE, folded

    @pl.when(j == pl.num_programs(2) - 1)
    def _():
        ce_out[...] = ce_acc[...]
        pt_out[...] = pt_acc[...]
        pp_out[...] = pp_acc[...]
        tt_out[...] = tt_acc[...]


def dc_and_bce_loss(low_res_logits, target, classes=2, dice_weight=0.8, *,
                    ts_max=1024, num_splits=2, approx_recip=False,
                    core_parallel=False):
    """Equivalent to DC_and_BCE_loss(classes, dice_weight)({'low_res_logits': x}, t).

    `low_res_logits` may be f32 or bf16 (cast in-kernel, bf16 halves the HBM
    stream); `target` may be any integer-valued dtype (float targets are
    truncated like torch's .long(); int8/int32 targets stream fewer bytes).
    """
    B, C, H, W = low_res_logits.shape
    assert C == classes, (C, classes)
    if target.ndim == 4:
        target = target[:, 0]
    HW = H * W

    # ---- tiling: pixels packed onto both sublane and lane axes -------------
    S = _ceil_div(HW, 128)                       # number of 128-pixel rows
    ts_max = max(8, (ts_max // 8) * 8)
    if S <= ts_max:
        nsplit, n_tiles = 1, 1
        ts = _round_up(S, 8)
    else:
        n_tiles = _ceil_div(S, ts_max)
        nsplit = num_splits if (num_splits > 1 and n_tiles >= num_splits) else 1
        n_tiles = _round_up(n_tiles, nsplit)
        ts = _round_up(_ceil_div(S, n_tiles), 8)  # balanced, 8-aligned, <= ts_max
    tps = n_tiles // nsplit                       # tiles per split
    s_pad = n_tiles * ts
    hw_pad = s_pad * 128

    # ---- free reshapes; pad only if HW is not already tile-aligned ---------
    logits = low_res_logits.reshape(B, C, HW)
    tgt = target.reshape(B, HW)
    if hw_pad != HW:
        # Controlled padding: logits=0 (uniform softmax) and target=classes
        # (one-hot == 0 for every real class).  Its exact contribution
        # (log C per pixel to the CE sum, 1/C^2 per class to z_sum, 0 to
        # intersect / y_sum) is subtracted analytically below, so the kernel
        # itself stays completely mask-free.
        logits = jnp.pad(logits, ((0, 0), (0, 0), (0, hw_pad - HW)))
        tgt = jnp.pad(tgt, ((0, 0), (0, hw_pad - HW)), constant_values=classes)
    logits = logits.reshape(B, C, s_pad, 128)
    tgt = tgt.reshape(B, s_pad, 128)

    kernel = functools.partial(_loss_kernel, n_classes=C,
                               approx_recip=approx_recip)

    if core_parallel:
        # TODO(synk): validate the CORE_PARALLEL path on multi-core (v7x)
        # parts; default stays plain "parallel" so v5e/v6e compile unchanged.
        sem = (pltpu.CORE_PARALLEL, pltpu.PARALLEL, pltpu.ARBITRARY)
    else:
        sem = ("parallel", "parallel", "arbitrary")

    ce_p, pt_p, pp_p, tt_p = pl.pallas_call(
        kernel,
        out_shape=(jax.ShapeDtypeStruct((nsplit * B, 1, 128), jnp.float32),
                   jax.ShapeDtypeStruct((nsplit * B, C, 1, 128), jnp.float32),
                   jax.ShapeDtypeStruct((nsplit * B, C, 1, 128), jnp.float32),
                   jax.ShapeDtypeStruct((nsplit * B, C, 1, 128), jnp.float32)),
        grid_spec=pltpu.PrefetchScalarGridSpec(
            num_scalar_prefetch=0,
            grid=(nsplit, B, tps),
            in_specs=[
                pl.BlockSpec((None, C, ts, 128),
                             lambda sp, b, j: (b, 0, sp * tps + j, 0)),
                pl.BlockSpec((None, ts, 128),
                             lambda sp, b, j: (b, sp * tps + j, 0)),
            ],
            out_specs=(
                pl.BlockSpec((None, 1, 128),
                             lambda sp, b, j: (sp * B + b, 0, 0)),
                pl.BlockSpec((None, C, 1, 128),
                             lambda sp, b, j: (sp * B + b, 0, 0, 0)),
                pl.BlockSpec((None, C, 1, 128),
                             lambda sp, b, j: (sp * B + b, 0, 0, 0)),
                pl.BlockSpec((None, C, 1, 128),
                             lambda sp, b, j: (sp * B + b, 0, 0, 0)),
            ),
            scratch_shapes=[pltpu.VMEM((1, 128), jnp.float32),
                            pltpu.VMEM((C, 1, 128), jnp.float32),
                            pltpu.VMEM((C, 1, 128), jnp.float32),
                            pltpu.VMEM((C, 1, 128), jnp.float32)]),
        compiler_params=pltpu.CompilerParams(
            dimension_semantics=sem,
            vmem_limit_bytes=48 * 1024 * 1024),
    )(logits, tgt)

    # ---- tiny scalar combine in plain JAX -----------------------------------
    smooth = 1e-5
    ce_sum = jnp.sum(ce_p)
    inter_c = jnp.sum(pt_p, axis=(0, 2, 3))                  # (C,)
    z_c = jnp.sum(pp_p, axis=(0, 2, 3))
    y_c = jnp.sum(tt_p, axis=(0, 2, 3))

    n_pad = B * (hw_pad - HW)                                # padded pixels total
    if n_pad:
        cf = jnp.float32(classes)
        ce_sum = ce_sum - jnp.float32(n_pad) * jnp.log(cf)
        z_c = z_c - jnp.float32(n_pad) * (1.0 / cf) * (1.0 / cf)

    loss_ce = ce_sum / (B * HW)                              # CrossEntropyLoss mean
    dice_per_class = 1.0 - (2.0 * inter_c + smooth) / (z_c + y_c + smooth)
    loss_dice = jnp.sum(dice_per_class) / classes
    return (1.0 - dice_weight) * loss_ce + dice_weight * loss_dice


def _reference(low_res_logits, target, classes=2, dice_weight=0.8):
    """Pure-JAX reference mirroring the PyTorch module."""
    if target.ndim == 4:
        target = target[:, 0, :, :]
    logits = low_res_logits.astype(jnp.float32)
    tgt = target.astype(jnp.int32)
    logp = jax.nn.log_softmax(logits, axis=1)
    ce = -jnp.mean(jnp.take_along_axis(logp, tgt[:, None, :, :], axis=1))
    p = jax.nn.softmax(logits, axis=1)
    onehot = jax.nn.one_hot(tgt, classes, axis=1, dtype=jnp.float32)
    smooth = 1e-5
    loss = 0.0
    for i in range(classes):
        inter = jnp.sum(p[:, i] * onehot[:, i])
        y = jnp.sum(onehot[:, i] * onehot[:, i])
        z = jnp.sum(p[:, i] * p[:, i])
        loss = loss + (1.0 - (2 * inter + smooth) / (z + y + smooth))
    dice = loss / classes
    return (1.0 - dice_weight) * ce + dice_weight * dice


if __name__ == "__main__":
    key = jax.random.PRNGKey(0)
    k1, k2, k3, k4 = jax.random.split(key, 4)

    # Test 1: module defaults (classes=2), float targets (forward applies
    # .long()), HW aligned -> single tile, no padding, no split.
    B, C, H, W = 2, 2, 32, 32
    logits = jax.random.normal(k1, (B, C, H, W), dtype=jnp.float32)
    target = jax.random.randint(k2, (B, 1, H, W), 0, C).astype(jnp.float32)
    loss = jax.block_until_ready(dc_and_bce_loss(logits, target, classes=C,
                                                 dice_weight=0.8))
    ref = _reference(logits, target, classes=C, dice_weight=0.8)
    assert jnp.allclose(loss, ref, rtol=1e-5, atol=1e-6), (loss, ref)

    # Test 2: classes=3, ragged HW (pad + analytic correction), multi-tile grid,
    # explicit 2-way pixel split, bf16 logits + int32 targets (narrow streams).
    B2, C2, H2, W2 = 2, 3, 40, 40
    logits2 = jax.random.normal(k3, (B2, C2, H2, W2)).astype(jnp.bfloat16)
    target2 = jax.random.randint(k4, (B2, 1, H2, W2), 0, C2)  # int32
    loss2 = jax.block_until_ready(
        dc_and_bce_loss(logits2, target2, classes=C2, dice_weight=0.8,
                        ts_max=8, num_splits=2))
    ref2 = _reference(logits2, target2, classes=C2, dice_weight=0.8)
    assert jnp.allclose(loss2, ref2, rtol=1e-4, atol=1e-5), (loss2, ref2)

    print("KERNEL_OK")
</pallas_src>

<mosaic_0001>
module attributes {stable_mosaic.version = 11 : i64} {
  func.func @_loss_kernel(%arg0: i32, %arg1: i32, %arg2: i32, %arg3: memref<1x2x8x128xf32, #tpu.memory_space<vmem>>, %arg4: memref<1x8x128xf32, #tpu.memory_space<vmem>>, %arg5: memref<1x1x128xf32, #tpu.memory_space<vmem>>, %arg6: memref<1x2x1x128xf32, #tpu.memory_space<vmem>>, %arg7: memref<1x2x1x128xf32, #tpu.memory_space<vmem>>, %arg8: memref<1x2x1x128xf32, #tpu.memory_space<vmem>>, %arg9: memref<1x128xf32, #tpu.memory_space<vmem>>, %arg10: memref<2x1x128xf32, #tpu.memory_space<vmem>>, %arg11: memref<2x1x128xf32, #tpu.memory_space<vmem>>, %arg12: memref<2x1x128xf32, #tpu.memory_space<vmem>>) attributes {dimension_semantics = [#tpu.dimension_semantics<parallel>, #tpu.dimension_semantics<parallel>, #tpu.dimension_semantics<arbitrary>], iteration_bounds = array<i64: 1, 2, 1>, scalar_prefetch = 0 : i64, scratch_operands = 4 : i64, tpu.core_type = #tpu.core_type<tc>, window_params = [{transform_indices = @transform_0, window_bounds = array<i64: 1, 2, 8, 128>}, {transform_indices = @transform_1, window_bounds = array<i64: 1, 8, 128>}, {transform_indices = @transform_2, window_bounds = array<i64: 1, 1, 128>}, {transform_indices = @transform_3, window_bounds = array<i64: 1, 2, 1, 128>}, {transform_indices = @transform_4, window_bounds = array<i64: 1, 2, 1, 128>}, {transform_indices = @transform_5, window_bounds = array<i64: 1, 2, 1, 128>}]} {
    %c0_i32 = arith.constant 0 : i32
    %0 = arith.cmpi eq, %arg2, %c0_i32 : i32
    %1 = arith.extui %0 : i1 to i32
    %c0_i32_0 = arith.constant 0 : i32
    %2 = arith.cmpi ne, %1, %c0_i32_0 : i32
    scf.if %2 {
      %cst_60 = arith.constant 0.000000e+00 : f32
      %95 = vector.broadcast %cst_60 : f32 to vector<1x128xf32>
      %c0_61 = arith.constant 0 : index
      %c0_62 = arith.constant 0 : index
      %96 = vector.load %arg9[%c0_61, %c0_62] : memref<1x128xf32, #tpu.memory_space<vmem>>, vector<1x128xf32>
      tpu.vector_store %arg9[%c0_61, %c0_62], %95 {strides = array<i32>} : memref<1x128xf32, #tpu.memory_space<vmem>>, vector<1x128xf32>,
      %cst_63 = arith.constant 0.000000e+00 : f32
      %97 = vector.broadcast %cst_63 : f32 to vector<2x1x128xf32>
      %c0_64 = arith.constant 0 : index
      %c0_65 = arith.constant 0 : index
      %c0_66 = arith.constant 0 : index
      %98 = vector.load %arg10[%c0_64, %c0_65, %c0_66] : memref<2x1x128xf32, #tpu.memory_space<vmem>>, vector<2x1x128xf32>
      tpu.vector_store %arg10[%c0_64, %c0_65, %c0_66], %97 {strides = array<i32>} : memref<2x1x128xf32, #tpu.memory_space<vmem>>, vector<2x1x128xf32>,
      %cst_67 = arith.constant 0.000000e+00 : f32
      %99 = vector.broadcast %cst_67 : f32 to vector<2x1x128xf32>
      %c0_68 = arith.constant 0 : index
      %c0_69 = arith.constant 0 : index
      %c0_70 = arith.constant 0 : index
      %100 = vector.load %arg11[%c0_68, %c0_69, %c0_70] : memref<2x1x128xf32, #tpu.memory_space<vmem>>, vector<2x1x128xf32>
      tpu.vector_store %arg11[%c0_68, %c0_69, %c0_70], %99 {strides = array<i32>} : memref<2x1x128xf32, #tpu.memory_space<vmem>>, vector<2x1x128xf32>,
      %cst_71 = arith.constant 0.000000e+00 : f32
      %101 = vector.broadcast %cst_71 : f32 to vector<2x1x128xf32>
      %c0_72 = arith.constant 0 : index
      %c0_73 = arith.constant 0 : index
      %c0_74 = arith.constant 0 : index
      %102 = vector.load %arg12[%c0_72, %c0_73, %c0_74] : memref<2x1x128xf32, #tpu.memory_space<vmem>>, vector<2x1x128xf32>
      tpu.vector_store %arg12[%c0_72, %c0_73, %c0_74], %101 {strides = array<i32>} : memref<2x1x128xf32, #tpu.memory_space<vmem>>, vector<2x1x128xf32>,
    } else {
    }
    %c0 = arith.constant 0 : index
    %c0_1 = arith.constant 0 : index
    %c0_2 = arith.constant 0 : index
    %3 = vector.load %arg4[%c0, %c0_1, %c0_2] : memref<1x8x128xf32, #tpu.memory_space<vmem>>, vector<1x8x128xf32>
    %4 = vector.shape_cast %3 : vector<1x8x128xf32> to vector<8x128xf32>
    %5 = arith.fptosi %4 : vector<8x128xf32> to vector<8x128xi32>
    %c0_3 = arith.constant 0 : index
    %c0_4 = arith.constant 0 : index
    %c0_5 = arith.constant 0 : index
    %c0_6 = arith.constant 0 : index
    %6 = vector.load %arg3[%c0_3, %c0_4, %c0_5, %c0_6] : memref<1x2x8x128xf32, #tpu.memory_space<vmem>>, vector<1x1x8x128xf32>
    %7 = vector.shape_cast %6 : vector<1x1x8x128xf32> to vector<8x128xf32>
    %c0_7 = arith.constant 0 : index
    %c1 = arith.constant 1 : index
    %c0_8 = arith.constant 0 : index
    %c0_9 = arith.constant 0 : index
    %8 = vector.load %arg3[%c0_7, %c1, %c0_8, %c0_9] : memref<1x2x8x128xf32, #tpu.memory_space<vmem>>, vector<1x1x8x128xf32>
    %9 = vector.shape_cast %8 : vector<1x1x8x128xf32> to vector<8x128xf32>
    %10 = arith.maximumf %7, %9 : vector<8x128xf32>
    %11 = arith.subf %7, %10 : vector<8x128xf32>
    %12 = math.exp %11 : vector<8x128xf32>
    %13 = arith.subf %9, %10 : vector<8x128xf32>
    %14 = math.exp %13 : vector<8x128xf32>
    %15 = arith.addf %12, %14 : vector<8x128xf32>
    %16 = tpu.reciprocal %15 : vector<8x128xf32> -> vector<8x128xf32>
    %17 = arith.mulf %12, %16 : vector<8x128xf32>
    %18 = arith.mulf %14, %16 : vector<8x128xf32>
    %19 = math.log %15 : vector<8x128xf32>
    %20 = arith.addf %10, %19 : vector<8x128xf32>
    %cst = arith.constant 0.000000e+00 : f32
    %21 = vector.broadcast %cst : f32 to vector<8x128xf32>
    %c0_i32_10 = arith.constant 0 : i32
    %22 = vector.broadcast %c0_i32_10 : i32 to vector<8x128xi32>
    %23 = arith.cmpi eq, %5, %22 : vector<8x128xi32>
    %24 = arith.extui %23 : vector<8x128xi1> to vector<8x128xi32>
    %25 = arith.sitofp %24 : vector<8x128xi32> to vector<8x128xf32>
    %26 = arith.mulf %7, %25 : vector<8x128xf32>
    %27 = arith.addf %21, %26 : vector<8x128xf32>
    %c0_11 = arith.constant 0 : index
    %c0_12 = arith.constant 0 : index
    %c0_13 = arith.constant 0 : index
    %28 = vector.load %arg10[%c0_11, %c0_12, %c0_13] : memref<2x1x128xf32, #tpu.memory_space<vmem>>, vector<1x1x128xf32>
    %29 = vector.shape_cast %28 : vector<1x1x128xf32> to vector<1x128xf32>
    %30 = arith.mulf %17, %25 : vector<8x128xf32>
    %cst_14 = arith.constant dense<0.000000e+00> : vector<128xf32>
    %31 = vector.multi_reduction <add>, %30, %cst_14 [0] : vector<8x128xf32> to vector<128xf32>
    %32 = vector.shape_cast %31 : vector<128xf32> to vector<1x128xf32>
    %33 = arith.addf %29, %32 : vector<1x128xf32>
    %c0_15 = arith.constant 0 : index
    %c0_16 = arith.constant 0 : index
    %c0_17 = arith.constant 0 : index
    %34 = vector.load %arg10[%c0_15, %c0_16, %c0_17] : memref<2x1x128xf32, #tpu.memory_space<vmem>>, vector<1x1x128xf32>
    %35 = vector.shape_cast %34 : vector<1x1x128xf32> to vector<1x128xf32>
    %36 = vector.shape_cast %33 : vector<1x128xf32> to vector<1x1x128xf32>
    tpu.vector_store %arg10[%c0_15, %c0_16, %c0_17], %36 {strides = array<i32>} : memref<2x1x128xf32, #tpu.memory_space<vmem>>, vector<1x1x128xf32>,
    %c0_18 = arith.constant 0 : index
    %c0_19 = arith.constant 0 : index
    %c0_20 = arith.constant 0 : index
    %37 = vector.load %arg11[%c0_18, %c0_19, %c0_20] : memref<2x1x128xf32, #tpu.memory_space<vmem>>, vector<1x1x128xf32>
    %38 = vector.shape_cast %37 : vector<1x1x128xf32> to vector<1x128xf32>
    %39 = arith.mulf %17, %17 : vector<8x128xf32>
    %cst_21 = arith.constant dense<0.000000e+00> : vector<128xf32>
    %40 = vector.multi_reduction <add>, %39, %cst_21 [0] : vector<8x128xf32> to vector<128xf32>
    %41 = vector.shape_cast %40 : vector<128xf32> to vector<1x128xf32>
    %42 = arith.addf %38, %41 : vector<1x128xf32>
    %c0_22 = arith.constant 0 : index
    %c0_23 = arith.constant 0 : index
    %c0_24 = arith.constant 0 : index
    %43 = vector.load %arg11[%c0_22, %c0_23, %c0_24] : memref<2x1x128xf32, #tpu.memory_space<vmem>>, vector<1x1x128xf32>
    %44 = vector.shape_cast %43 : vector<1x1x128xf32> to vector<1x128xf32>
    %45 = vector.shape_cast %42 : vector<1x128xf32> to vector<1x1x128xf32>
    tpu.vector_store %arg11[%c0_22, %c0_23, %c0_24], %45 {strides = array<i32>} : memref<2x1x128xf32, #tpu.memory_space<vmem>>, vector<1x1x128xf32>,
    %c0_25 = arith.constant 0 : index
    %c0_26 = arith.constant 0 : index
    %c0_27 = arith.constant 0 : index
    %46 = vector.load %arg12[%c0_25, %c0_26, %c0_27] : memref<2x1x128xf32, #tpu.memory_space<vmem>>, vector<1x1x128xf32>
    %47 = vector.shape_cast %46 : vector<1x1x128xf32> to vector<1x128xf32>
    %cst_28 = arith.constant dense<0.000000e+00> : vector<128xf32>
    %48 = vector.multi_reduction <add>, %25, %cst_28 [0] : vector<8x128xf32> to vector<128xf32>
    %49 = vector.shape_cast %48 : vector<128xf32> to vector<1x128xf32>
    %50 = arith.addf %47, %49 : vector<1x128xf32>
    %c0_29 = arith.constant 0 : index
    %c0_30 = arith.constant 0 : index
    %c0_31 = arith.constant 0 : index
    %51 = vector.load %arg12[%c0_29, %c0_30, %c0_31] : memref<2x1x128xf32, #tpu.memory_space<vmem>>, vector<1x1x128xf32>
    %52 = vector.shape_cast %51 : vector<1x1x128xf32> to vector<1x128xf32>
    %53 = vector.shape_cast %50 : vector<1x128xf32> to vector<1x1x128xf32>
    tpu.vector_store %arg12[%c0_29, %c0_30, %c0_31], %53 {strides = array<i32>} : memref<2x1x128xf32, #tpu.memory_space<vmem>>, vector<1x1x128xf32>,
    %c1_i32 = arith.constant 1 : i32
    %54 = vector.broadcast %c1_i32 : i32 to vector<8x128xi32>
    %55 = arith.cmpi eq, %5, %54 : vector<8x128xi32>
    %56 = arith.extui %55 : vector<8x128xi1> to vector<8x128xi32>
    %57 = arith.sitofp %56 : vector<8x128xi32> to vector<8x128xf32>
    %58 = arith.mulf %9, %57 : vector<8x128xf32>
    %59 = arith.addf %27, %58 : vector<8x128xf32>
    %c1_32 = arith.constant 1 : index
    %c0_33 = arith.constant 0 : index
    %c0_34 = arith.constant 0 : index
    %60 = vector.load %arg10[%c1_32, %c0_33, %c0_34] : memref<2x1x128xf32, #tpu.memory_space<vmem>>, vector<1x1x128xf32>
    %61 = vector.shape_cast %60 : vector<1x1x128xf32> to vector<1x128xf32>
    %62 = arith.mulf %18, %57 : vector<8x128xf32>
    %cst_35 = arith.constant dense<0.000000e+00> : vector<128xf32>
    %63 = vector.multi_reduction <add>, %62, %cst_35 [0] : vector<8x128xf32> to vector<128xf32>
    %64 = vector.shape_cast %63 : vector<128xf32> to vector<1x128xf32>
    %65 = arith.addf %61, %64 : vector<1x128xf32>
    %c1_36 = arith.constant 1 : index
    %c0_37 = arith.constant 0 : index
    %c0_38 = arith.constant 0 : index
    %66 = vector.load %arg10[%c1_36, %c0_37, %c0_38] : memref<2x1x128xf32, #tpu.memory_space<vmem>>, vector<1x1x128xf32>
    %67 = vector.shape_cast %66 : vector<1x1x128xf32> to vector<1x128xf32>
    %68 = vector.shape_cast %65 : vector<1x128xf32> to vector<1x1x128xf32>
    tpu.vector_store %arg10[%c1_36, %c0_37, %c0_38], %68 {strides = array<i32>} : memref<2x1x128xf32, #tpu.memory_space<vmem>>, vector<1x1x128xf32>,
    %c1_39 = arith.constant 1 : index
    %c0_40 = arith.constant 0 : index
    %c0_41 = arith.constant 0 : index
    %69 = vector.load %arg11[%c1_39, %c0_40, %c0_41] : memref<2x1x128xf32, #tpu.memory_space<vmem>>, vector<1x1x128xf32>
    %70 = vector.shape_cast %69 : vector<1x1x128xf32> to vector<1x128xf32>
    %71 = arith.mulf %18, %18 : vector<8x128xf32>
    %cst_42 = arith.constant dense<0.000000e+00> : vector<128xf32>
    %72 = vector.multi_reduction <add>, %71, %cst_42 [0] : vector<8x128xf32> to vector<128xf32>
    %73 = vector.shape_cast %72 : vector<128xf32> to vector<1x128xf32>
    %74 = arith.addf %70, %73 : vector<1x128xf32>
    %c1_43 = arith.constant 1 : index
    %c0_44 = arith.constant 0 : index
    %c0_45 = arith.constant 0 : index
    %75 = vector.load %arg11[%c1_43, %c0_44, %c0_45] : memref<2x1x128xf32, #tpu.memory_space<vmem>>, vector<1x1x128xf32>
    %76 = vector.shape_cast %75 : vector<1x1x128xf32> to vector<1x128xf32>
    %77 = vector.shape_cast %74 : vector<1x128xf32> to vector<1x1x128xf32>
    tpu.vector_store %arg11[%c1_43, %c0_44, %c0_45], %77 {strides = array<i32>} : memref<2x1x128xf32, #tpu.memory_space<vmem>>, vector<1x1x128xf32>,
    %c1_46 = arith.constant 1 : index
    %c0_47 = arith.constant 0 : index
    %c0_48 = arith.constant 0 : index
    %78 = vector.load %arg12[%c1_46, %c0_47, %c0_48] : memref<2x1x128xf32, #tpu.memory_space<vmem>>, vector<1x1x128xf32>
    %79 = vector.shape_cast %78 : vector<1x1x128xf32> to vector<1x128xf32>
    %cst_49 = arith.constant dense<0.000000e+00> : vector<128xf32>
    %80 = vector.multi_reduction <add>, %57, %cst_49 [0] : vector<8x128xf32> to vector<128xf32>
    %81 = vector.shape_cast %80 : vector<128xf32> to vector<1x128xf32>
    %82 = arith.addf %79, %81 : vector<1x128xf32>
    %c1_50 = arith.constant 1 : index
    %c0_51 = arith.constant 0 : index
    %c0_52 = arith.constant 0 : index
    %83 = vector.load %arg12[%c1_50, %c0_51, %c0_52] : memref<2x1x128xf32, #tpu.memory_space<vmem>>, vector<1x1x128xf32>
    %84 = vector.shape_cast %83 : vector<1x1x128xf32> to vector<1x128xf32>
    %85 = vector.shape_cast %82 : vector<1x128xf32> to vector<1x1x128xf32>
    tpu.vector_store %arg12[%c1_50, %c0_51, %c0_52], %85 {strides = array<i32>} : memref<2x1x128xf32, #tpu.memory_space<vmem>>, vector<1x1x128xf32>,
    %c0_53 = arith.constant 0 : index
    %c0_54 = arith.constant 0 : index
    %86 = vector.load %arg9[%c0_53, %c0_54] : memref<1x128xf32, #tpu.memory_space<vmem>>, vector<1x128xf32>
    %87 = arith.subf %20, %59 : vector<8x128xf32>
    %cst_55 = arith.constant dense<0.000000e+00> : vector<128xf32>
    %88 = vector.multi_reduction <add>, %87, %cst_55 [0] : vector<8x128xf32> to vector<128xf32>
    %89 = vector.shape_cast %88 : vector<128xf32> to vector<1x128xf32>
    %90 = arith.addf %86, %89 : vector<1x128xf32>
    %c0_56 = arith.constant 0 : index
    %c0_57 = arith.constant 0 : index
    %91 = vector.load %arg9[%c0_56, %c0_57] : memref<1x128xf32, #tpu.memory_space<vmem>>, vector<1x128xf32>
    tpu.vector_store %arg9[%c0_56, %c0_57], %90 {strides = array<i32>} : memref<1x128xf32, #tpu.memory_space<vmem>>, vector<1x128xf32>,
    %c0_i32_58 = arith.constant 0 : i32
    %92 = arith.cmpi eq, %arg2, %c0_i32_58 : i32
    %93 = arith.extui %92 : i1 to i32
    %c0_i32_59 = arith.constant 0 : i32
    %94 = arith.cmpi ne, %93, %c0_i32_59 : i32
    scf.if %94 {
      %c0_60 = arith.constant 0 : index
      %c0_61 = arith.constant 0 : index
      %95 = vector.load %arg9[%c0_60, %c0_61] : memref<1x128xf32, #tpu.memory_space<vmem>>, vector<1x128xf32>
      %c0_62 = arith.constant 0 : index
      %c0_63 = arith.constant 0 : index
      %c0_64 = arith.constant 0 : index
      %96 = vector.load %arg5[%c0_62, %c0_63, %c0_64] : memref<1x1x128xf32, #tpu.memory_space<vmem>>, vector<1x1x128xf32>
      %97 = vector.shape_cast %96 : vector<1x1x128xf32> to vector<1x128xf32>
      %98 = vector.shape_cast %95 : vector<1x128xf32> to vector<1x1x128xf32>
      tpu.vector_store %arg5[%c0_62, %c0_63, %c0_64], %98 {strides = array<i32>} : memref<1x1x128xf32, #tpu.memory_space<vmem>>, vector<1x1x128xf32>,
      %c0_65 = arith.constant 0 : index
      %c0_66 = arith.constant 0 : index
      %c0_67 = arith.constant 0 : index
      %99 = vector.load %arg10[%c0_65, %c0_66, %c0_67] : memref<2x1x128xf32, #tpu.memory_space<vmem>>, vector<2x1x128xf32>
      %c0_68 = arith.constant 0 : index
      %c0_69 = arith.constant 0 : index
      %c0_70 = arith.constant 0 : index
      %c0_71 = arith.constant 0 : index
      %100 = vector.load %arg6[%c0_68, %c0_69, %c0_70, %c0_71] : memref<1x2x1x128xf32, #tpu.memory_space<vmem>>, vector<1x2x1x128xf32>
      %101 = vector.shape_cast %100 : vector<1x2x1x128xf32> to vector<2x1x128xf32>
      %102 = vector.shape_cast %99 : vector<2x1x128xf32> to vector<1x2x1x128xf32>
      tpu.vector_store %arg6[%c0_68, %c0_69, %c0_70, %c0_71], %102 {strides = array<i32>} : memref<1x2x1x128xf32, #tpu.memory_space<vmem>>, vector<1x2x1x128xf32>,
      %c0_72 = arith.constant 0 : index
      %c0_73 = arith.constant 0 : index
      %c0_74 = arith.constant 0 : index
      %103 = vector.load %arg11[%c0_72, %c0_73, %c0_74] : memref<2x1x128xf32, #tpu.memory_space<vmem>>, vector<2x1x128xf32>
      %c0_75 = arith.constant 0 : index
      %c0_76 = arith.constant 0 : index
      %c0_77 = arith.constant 0 : index
      %c0_78 = arith.constant 0 : index
      %104 = vector.load %arg7[%c0_75, %c0_76, %c0_77, %c0_78] : memref<1x2x1x128xf32, #tpu.memory_space<vmem>>, vector<1x2x1x128xf32>
      %105 = vector.shape_cast %104 : vector<1x2x1x128xf32> to vector<2x1x128xf32>
      %106 = vector.shape_cast %103 : vector<2x1x128xf32> to vector<1x2x1x128xf32>
      tpu.vector_store %arg7[%c0_75, %c0_76, %c0_77, %c0_78], %106 {strides = array<i32>} : memref<1x2x1x128xf32, #tpu.memory_space<vmem>>, vector<1x2x1x128xf32>,
      %c0_79 = arith.constant 0 : index
      %c0_80 = arith.constant 0 : index
      %c0_81 = arith.constant 0 : index
      %107 = vector.load %arg12[%c0_79, %c0_80, %c0_81] : memref<2x1x128xf32, #tpu.memory_space<vmem>>, vector<2x1x128xf32>
      %c0_82 = arith.constant 0 : index
      %c0_83 = arith.constant 0 : index
      %c0_84 = arith.constant 0 : index
      %c0_85 = arith.constant 0 : index
      %108 = vector.load %arg8[%c0_82, %c0_83, %c0_84, %c0_85] : memref<1x2x1x128xf32, #tpu.memory_space<vmem>>, vector<1x2x1x128xf32>
      %109 = vector.shape_cast %108 : vector<1x2x1x128xf32> to vector<2x1x128xf32>
      %110 = vector.shape_cast %107 : vector<2x1x128xf32> to vector<1x2x1x128xf32>
      tpu.vector_store %arg8[%c0_82, %c0_83, %c0_84, %c0_85], %110 {strides = array<i32>} : memref<1x2x1x128xf32, #tpu.memory_space<vmem>>, vector<1x2x1x128xf32>,
    } else {
    }
    return
  }
  func.func @transform_0(%arg0: i32, %arg1: i32, %arg2: i32) -> (i32, i32, i32, i32) {
    %c1_i32 = arith.constant 1 : i32
    %0 = arith.muli %arg0, %c1_i32 : i32
    %1 = arith.addi %0, %arg2 : i32
    %c0_i32 = arith.constant 0 : i32
    %c0_i32_0 = arith.constant 0 : i32
    %c0_i32_1 = arith.constant 0 : i32
    return %arg1, %c0_i32, %1, %c0_i32_0 : i32, i32, i32, i32
  }
  func.func @transform_1(%arg0: i32, %arg1: i32, %arg2: i32) -> (i32, i32, i32) {
    %c1_i32 = arith.constant 1 : i32
    %0 = arith.muli %arg0, %c1_i32 : i32
    %1 = arith.addi %0, %arg2 : i32
    %c0_i32 = arith.constant 0 : i32
    %c0_i32_0 = arith.constant 0 : i32
    return %arg1, %1, %c0_i32 : i32, i32, i32
  }
  func.func @transform_2(%arg0: i32, %arg1: i32, %arg2: i32) -> (i32, i32, i32) {
    %c2_i32 = arith.constant 2 : i32
    %0 = arith.muli %arg0, %c2_i32 : i32
    %1 = arith.addi %0, %arg1 : i32
    %c0_i32 = arith.constant 0 : i32
    %c0_i32_0 = arith.constant 0 : i32
    %c0_i32_1 = arith.constant 0 : i32
    return %1, %c0_i32, %c0_i32_0 : i32, i32, i32
  }
  func.func @transform_3(%arg0: i32, %arg1: i32, %arg2: i32) -> (i32, i32, i32, i32) {
    %c2_i32 = arith.constant 2 : i32
    %0 = arith.muli %arg0, %c2_i32 : i32
    %1 = arith.addi %0, %arg1 : i32
    %c0_i32 = arith.constant 0 : i32
    %c0_i32_0 = arith.constant 0 : i32
    %c0_i32_1 = arith.constant 0 : i32
    %c0_i32_2 = arith.constant 0 : i32
    return %1, %c0_i32, %c0_i32_0, %c0_i32_1 : i32, i32, i32, i32
  }
  func.func @transform_4(%arg0: i32, %arg1: i32, %arg2: i32) -> (i32, i32, i32, i32) {
    %c2_i32 = arith.constant 2 : i32
    %0 = arith.muli %arg0, %c2_i32 : i32
    %1 = arith.addi %0, %arg1 : i32
    %c0_i32 = arith.constant 0 : i32
    %c0_i32_0 = arith.constant 0 : i32
    %c0_i32_1 = arith.constant 0 : i32
    %c0_i32_2 = arith.constant 0 : i32
    return %1, %c0_i32, %c0_i32_0, %c0_i32_1 : i32, i32, i32, i32
  }
  func.func @transform_5(%arg0: i32, %arg1: i32, %arg2: i32) -> (i32, i32, i32, i32) {
    %c2_i32 = arith.constant 2 : i32
    %0 = arith.muli %arg0, %c2_i32 : i32
    %1 = arith.addi %0, %arg1 : i32
    %c0_i32 = arith.constant 0 : i32
    %c0_i32_0 = arith.constant 0 : i32
    %c0_i32_1 = arith.constant 0 : i32
    %c0_i32_2 = arith.constant 0 : i32
    return %1, %c0_i32, %c0_i32_0, %c0_i32_1 : i32, i32, i32, i32
  }
}

</mosaic_0001>

<llo_original>
// kernel: tpu_custom_call.1
$region0: #{tpu_custom_call.1}
  #allocation0 [shape = 'u32[]', space=smem, size = 0x4, offset = 0x4, fixed_abs, tag = 'smem constant byte address 0x4 - core index']
  #allocation1 [shape = 'u32[144,128]{1,0:T(1,128)}', space=vmem, size = 0x12000, scoped, tag = 'internal scratch']
  #allocation2 [shape = 'f32[1,128]{1,0:T(1,128)}', space=vmem, size = 0x200, scoped, tag = 'scratch operand']
  #allocation3 [shape = 'f32[2,1,128]{2,1,0:T(1,128)}', space=vmem, size = 0x400, scoped, tag = 'scratch operand']
  #allocation4 [shape = 'f32[2,1,128]{2,1,0:T(1,128)}', space=vmem, size = 0x400, scoped, tag = 'scratch operand']
  #allocation5 [shape = 'f32[2,1,128]{2,1,0:T(1,128)}', space=vmem, size = 0x400, scoped, tag = 'scratch operand']
  %s0 = inlined_call_operand.hbm [shape: f32[2,2,8,128], index: 0, kind: input, shape index: {}]
  %s1 = inlined_call_operand.hbm [shape: f32[2,8,128], index: 1, kind: input, shape index: {}]
  %s2 = inlined_call_operand.hbm [shape: f32[2,1,128], index: 2, kind: output, shape index: {0}]
  %s3 = inlined_call_operand.hbm [shape: f32[2,2,1,128], index: 3, kind: output, shape index: {1}]
  %s4 = inlined_call_operand.hbm [shape: f32[2,2,1,128], index: 4, kind: output, shape index: {2}]
  %s5 = inlined_call_operand.hbm [shape: f32[2,2,1,128], index: 5, kind: output, shape index: {3}]
  %6 = xla_tuple %s2, %s3, %s4, %s5
  %s7 = sld [smem:[#allocation0]]
  $region81: #{tpu_custom_call.1} parent=0
    _
  %s9 = ssub.s32 1, %s7
  %s10 = scalar_select 0, %s9, %s7
  $region1: #{tpu_custom_call.1} parent=0
    #allocation6 [shape = 'u8[16384]{0}', space=vmem, size = 0x4000, scoped, tag = 'input window, operand 0']
    #allocation7 [shape = 's32[2]{0}', space=sflag, size = 0x8, scoped, tag = 'scoped memory for tpu_custom_call.1']
    #allocation8 [shape = 's32[2]{0}', space=sflag, size = 0x8, scoped, tag = 'scoped memory for tpu_custom_call.1']
    #allocation9 [shape = 'u8[8192]{0}', space=vmem, size = 0x2000, scoped, tag = 'input window, operand 1']
    #allocation10 [shape = 's32[2]{0}', space=sflag, size = 0x8, scoped, tag = 'scoped memory for tpu_custom_call.1']
    #allocation11 [shape = 'u8[1024]{0}', space=vmem, size = 0x400, scoped, tag = 'output window, operand 0']
    #allocation12 [shape = 'u8[2048]{0}', space=vmem, size = 0x800, scoped, tag = 'output window, operand 1']
    #allocation13 [shape = 's32[2]{0}', space=sflag, size = 0x8, scoped, tag = 'scoped memory for tpu_custom_call.1']
    #allocation14 [shape = 'u8[2048]{0}', space=vmem, size = 0x800, scoped, tag = 'output window, operand 2']
    #allocation15 [shape = 'u8[2048]{0}', space=vmem, size = 0x800, scoped, tag = 'output window, operand 3']
    #allocation16 [shape = 's32[2]{0}', space=sflag, size = 0x8, scoped, tag = 'scoped memory for tpu_custom_call.1']
    %11 = vsyncpa [#allocation7], 0
    %s12 = scalar_lea.sflag [#allocation7], 1
    %13 = vsyncpa %s12, 0
    %14 = vsyncpa [#allocation10], 0
    %s15 = scalar_lea.sflag [#allocation10], 1
    %16 = vsyncpa %s15, 0
    %17 = vsyncpa [#allocation8], 0
    %s18 = scalar_lea.sflag [#allocation8], 1
    %19 = vsyncpa %s18, 0
    %20 = vsyncpa [#allocation13], 0
    %s21 = scalar_lea.sflag [#allocation13], 1
    %22 = vsyncpa %s21, 0
    %23 = vsyncpa [#allocation16], 0
    %s24 = scalar_lea.sflag [#allocation16], 1
    %25 = vsyncpa %s24, 0
    loop: start=0, step=1, limit=4
    $region2: #{tpu_custom_call.1} parent=1 // loop_pre_header
      _
    $region3: #{tpu_custom_call.1} parent=1 // loop_header
      %s27 = sphi 0, %s31
      %p28 = scmp.ge.s32.totalorder %s27, 4
      %s34 = sphi 0, %s53
      %s35 = sphi 0, %s49
      %s36 = sphi 0, %s45
      %s37 = sphi 0, %s34
      %s38 = sphi 0, %s35
      %s39 = sphi 0, %s36
      %s40 = sphi 0, %s37
      %s41 = sphi 0, %s38
      %s42 = sphi 0, %s39
      %s60 = sphi 0, %s62
      %s63 = sphi 0, %s60
      %s64 = sphi 0, %s63
      %s80 = sphi 0, %s64
      %s90 = sphi 0, %s92
      %s93 = sphi 0, %s90
      %s94 = sphi 0, %s93
      %s110 = sphi 0, %s94
      %s120 = sphi 0, %s122
      %s123 = sphi 0, %s120
      %s124 = sphi 0, %s123
      %s140 = sphi 0, %s124
      %s150 = sphi 0, %s152
      %s153 = sphi 0, %s150
      %s154 = sphi 0, %s153
      %s170 = sphi 0, %s154
      %s180 = sphi 0, %s182
      %s183 = sphi 0, %s180
      %s184 = sphi 0, %s183
      %s200 = sphi 0, %s184
      %s210 = sphi 0, %s212
      %s213 = sphi 0, %s210
      %s214 = sphi 0, %s213
      %s230 = sphi 0, %s214
    $region4: #{tpu_custom_call.1} parent=1 // loop_header_branch
      %30 = sbr.rel (%p28) target = $region8
    $region5: #{tpu_custom_call.1} parent=1 // loop_body
      %s32 = ssub.s32 %s27, 1
      %s33 = ssub.s32 %s27, 2
      %s43 = sadd.s32 1, %s36
      %p44 = scmp.ge.s32.totalorder %s43, 1
      %s45 = scalar_select %p44, 0, %s43
      %s46 = sadd.s32 1, %s35
      %s47 = scalar_select %p44, %s46, %s35
      %p48 = scmp.ge.s32.totalorder %s47, 2
      %s49 = scalar_select %p48, 0, %s47
      %s50 = sadd.s32 1, %s34
      %s51 = scalar_select %p48, %s50, %s34
      %p52 = scmp.ge.s32.totalorder %s51, 1
      %s53 = scalar_select %p52, 0, %s51
      %s54 = sadd.s32 %s34, %s36
      %s55 = sadd.s32 %s53, %s45
      %s56 = ssub.s32 %s35, %s49
      %s57 = ssub.s32 %s54, %s55
      %s58 = sor.u32 %s56, %s57
      %p59 = scmp.eq.s32.totalorder %s58, 0
      %s61 = sadd.s32 %s60, 1
      %s62 = scalar_select %p59, %s60, %s61
      %p65 = pneg %p59
      %p66 = scmp.eq.s32.totalorder %s27, 1
      %p67 = por %p65, %p66
      %p68 = scmp.ne.s32.totalorder %s60, %s63
      %p69 = scmp.eq.s32.totalorder %s27, 0
      %p70 = por %p68, %p69
      %p71 = scmp.ne.s32.totalorder %s60, %s63
      %p72 = scmp.eq.s32.totalorder %s32, 1
      %p73 = por %p71, %p72
      %p74 = scmp.ne.s32.totalorder %s63, %s64
      %p75 = scmp.eq.s32.totalorder %s32, 0
      %p76 = por %p74, %p75
      %p77 = scmp.ne.s32.totalorder %s63, %s64
      %p78 = scmp.eq.s32.totalorder %s33, 1
      %p79 = por %p77, %p78
      %p81 = scmp.ne.s32.totalorder %s64, %s80
      %p82 = scmp.eq.s32.totalorder %s33, 0
      %p83 = por %p81, %p82
      %s84 = sadd.s32 %s34, %s36
      %s85 = sadd.s32 %s53, %s45
      %s86 = ssub.s32 %s35, %s49
      %s87 = ssub.s32 %s84, %s85
      %s88 = sor.u32 %s86, %s87
      %p89 = scmp.eq.s32.totalorder %s88, 0
      %s91 = sadd.s32 %s90, 1
      %s92 = scalar_select %p89, %s90, %s91
      %p95 = pneg %p89
      %p96 = scmp.eq.s32.totalorder %s27, 1
      %p97 = por %p95, %p96
      %p98 = scmp.ne.s32.totalorder %s90, %s93
      %p99 = scmp.eq.s32.totalorder %s27, 0
      %p100 = por %p98, %p99
      %p101 = scmp.ne.s32.totalorder %s90, %s93
      %p102 = scmp.eq.s32.totalorder %s32, 1
      %p103 = por %p101, %p102
      %p104 = scmp.ne.s32.totalorder %s93, %s94
      %p105 = scmp.eq.s32.totalorder %s32, 0
      %p106 = por %p104, %p105
      %p107 = scmp.ne.s32.totalorder %s93, %s94
      %p108 = scmp.eq.s32.totalorder %s33, 1
      %p109 = por %p107, %p108
      %p111 = scmp.ne.s32.totalorder %s94, %s110
      %p112 = scmp.eq.s32.totalorder %s33, 0
      %p113 = por %p111, %p112
      %s114 = smul.u32 %s34, 2
      %s115 = sadd.s32 %s114, %s35
      %s116 = smul.u32 %s53, 2
      %s117 = sadd.s32 %s116, %s49
      %s118 = ssub.s32 %s115, %s117
      %p119 = scmp.eq.s32.totalorder %s118, 0
      %s121 = sadd.s32 %s120, 1
      %s122 = scalar_select %p119, %s120, %s121
      %p125 = pneg %p119
      %p126 = scmp.eq.s32.totalorder %s27, 1
      %p127 = por %p125, %p126
      %p128 = scmp.ne.s32.totalorder %s120, %s123
      %p129 = scmp.eq.s32.totalorder %s27, 0
      %p130 = por %p128, %p129
      %p131 = scmp.ne.s32.totalorder %s120, %s123
      %p132 = scmp.eq.s32.totalorder %s32, 1
      %p133 = por %p131, %p132
      %p134 = scmp.ne.s32.totalorder %s123, %s124
      %p135 = scmp.eq.s32.totalorder %s32, 0
      %p136 = por %p134, %p135
      %p137 = scmp.ne.s32.totalorder %s123, %s124
      %p138 = scmp.eq.s32.totalorder %s33, 1
      %p139 = por %p137, %p138
      %p141 = scmp.ne.s32.totalorder %s124, %s140
      %p142 = scmp.eq.s32.totalorder %s33, 0
      %p143 = por %p141, %p142
      %s144 = smul.u32 %s34, 2
      %s145 = sadd.s32 %s144, %s35
      %s146 = smul.u32 %s53, 2
      %s147 = sadd.s32 %s146, %s49
      %s148 = ssub.s32 %s145, %s147
      %p149 = scmp.eq.s32.totalorder %s148, 0
      %s151 = sadd.s32 %s150, 1
      %s152 = scalar_select %p149, %s150, %s151
      %p155 = pneg %p149
      %p156 = scmp.eq.s32.totalorder %s27, 1
      %p157 = por %p155, %p156
      %p158 = scmp.ne.s32.totalorder %s150, %s153
      %p159 = scmp.eq.s32.totalorder %s27, 0
      %p160 = por %p158, %p159
      %p161 = scmp.ne.s32.totalorder %s150, %s153
      %p162 = scmp.eq.s32.totalorder %s32, 1
      %p163 = por %p161, %p162
      %p164 = scmp.ne.s32.totalorder %s153, %s154
      %p165 = scmp.eq.s32.totalorder %s32, 0
      %p166 = por %p164, %p165
      %p167 = scmp.ne.s32.totalorder %s153, %s154
      %p168 = scmp.eq.s32.totalorder %s33, 1
      %p169 = por %p167, %p168
      %p171 = scmp.ne.s32.totalorder %s154, %s170
      %p172 = scmp.eq.s32.totalorder %s33, 0
      %p173 = por %p171, %p172
      %s174 = smul.u32 %s34, 2
      %s175 = sadd.s32 %s174, %s35
      %s176 = smul.u32 %s53, 2
      %s177 = sadd.s32 %s176, %s49
      %s178 = ssub.s32 %s175, %s177
      %p179 = scmp.eq.s32.totalorder %s178, 0
      %s181 = sadd.s32 %s180, 1
      %s182 = scalar_select %p179, %s180, %s181
      %p185 = pneg %p179
      %p186 = scmp.eq.s32.totalorder %s27, 1
      %p187 = por %p185, %p186
      %p188 = scmp.ne.s32.totalorder %s180, %s183
      %p189 = scmp.eq.s32.totalorder %s27, 0
      %p190 = por %p188, %p189
      %p191 = scmp.ne.s32.totalorder %s180, %s183
      %p192 = scmp.eq.s32.totalorder %s32, 1
      %p193 = por %p191, %p192
      %p194 = scmp.ne.s32.totalorder %s183, %s184
      %p195 = scmp.eq.s32.totalorder %s32, 0
      %p196 = por %p194, %p195
      %p197 = scmp.ne.s32.totalorder %s183, %s184
      %p198 = scmp.eq.s32.totalorder %s33, 1
      %p199 = por %p197, %p198
      %p201 = scmp.ne.s32.totalorder %s184, %s200
      %p202 = scmp.eq.s32.totalorder %s33, 0
      %p203 = por %p201, %p202
      %s204 = smul.u32 %s34, 2
      %s205 = sadd.s32 %s204, %s35
      %s206 = smul.u32 %s53, 2
      %s207 = sadd.s32 %s206, %s49
      %s208 = ssub.s32 %s205, %s207
      %p209 = scmp.eq.s32.totalorder %s208, 0
      %s211 = sadd.s32 %s210, 1
      %s212 = scalar_select %p209, %s210, %s211
      %p215 = pneg %p209
      %p216 = scmp.eq.s32.totalorder %s27, 1
      %p217 = por %p215, %p216
      %p218 = scmp.ne.s32.totalorder %s210, %s213
      %p219 = scmp.eq.s32.totalorder %s27, 0
      %p220 = por %p218, %p219
      %p221 = scmp.ne.s32.totalorder %s210, %s213
      %p222 = scmp.eq.s32.totalorder %s32, 1
      %p223 = por %p221, %p222
      %p224 = scmp.ne.s32.totalorder %s213, %s214
      %p225 = scmp.eq.s32.totalorder %s32, 0
      %p226 = por %p224, %p225
      %p227 = scmp.ne.s32.totalorder %s213, %s214
      %p228 = scmp.eq.s32.totalorder %s33, 1
      %p229 = por %p227, %p228
      %p231 = scmp.ne.s32.totalorder %s214, %s230
      %p232 = scmp.eq.s32.totalorder %s33, 0
      %p233 = por %p231, %p232
      %p234 = scmp.le.s32.totalorder 1, %s27
      %p235 = scmp.lt.s32.totalorder %s27, 3
      %p236 = pnand %p234, %p235
      %p237 = pneg %p236
      // Predicated region
      $region9: #{tpu_custom_call.1} parent=5 // pred_check
        _
      $region10: #{tpu_custom_call.1} parent=5 // pred_check_branch
        %239 = sbr.rel (%p236) target = $region12
      $region11: #{tpu_custom_call.1} parent=5 // pred_region
        %s240 = ssub.s32 %s27, 1
      $region12: #{tpu_custom_call.1} parent=5 // pred_fallthru
        _
      %p241 = scmp.lt.s32.totalorder %s27, 2
      // Predicated region
      $region13: #{tpu_custom_call.1} parent=5 // pred_check
        %p242 = pneg %p241
      $region14: #{tpu_custom_call.1} parent=5 // pred_check_branch
        %244 = sbr.rel (%p242) target = $region16
      $region15: #{tpu_custom_call.1} parent=5 // pred_region
        // Predicated region
        $region17: #{tpu_custom_call.1} parent=15 // pred_check
          %p245 = pneg %p70
        $region18: #{tpu_custom_call.1} parent=15 // pred_check_branch
          %247 = sbr.rel (%p245) target = $region20
        $region19: #{tpu_custom_call.1} parent=15 // pred_region
          %s248 = sand.u32 %s60, 1
          %s249 = scalar_lea.sflag [#allocation7], %s248
          %s250 = sand.u32 %s60, 1
          %s251 = smul.addr %s250, 16
          %s252 = scalar_lea.vmem [#allocation6], %s251
          %s253 = sadd.s32 %s34, %s36
          %s255 = ssub.s32 256, 256
          %256 = vsyncadd %s249, %s255
          %s257 = smul.addr %s35, 2
          %s258 = sadd.s32 %s253, %s257
          %s259 = smul.addr %s258, 128
          %s260 = scalar_lea.hbm %s0, %s259
          %s261 = sshll.u32 %s252, 4
          %s262 = int_to_ptr.vmem [resolvable:$true] %s261
          %267 = dma.hbm_to_vmem [thread:$0]  %s260, 256, %s262, %s249, 128, 128, 8
        $region20: #{tpu_custom_call.1} parent=15 // pred_fallthru
          _
        // Predicated region
        $region21: #{tpu_custom_call.1} parent=15 // pred_check
          %p268 = pneg %p100
        $region22: #{tpu_custom_call.1} parent=15 // pred_check_branch
          %270 = sbr.rel (%p268) target = $region24
        $region23: #{tpu_custom_call.1} parent=15 // pred_region
          %s271 = sand.u32 %s90, 1
          %s272 = scalar_lea.sflag [#allocation10], %s271
          %s273 = sand.u32 %s90, 1
          %s274 = smul.addr %s273, 8
          %s275 = scalar_lea.vmem [#allocation9], %s274
          %s276 = sadd.s32 %s34, %s36
          %s278 = ssub.s32 128, 128
          %279 = vsyncadd %s272, %s278
          %s280 = sadd.s32 %s276, %s35
          %s281 = smul.addr %s280, 128
          %s282 = scalar_lea.hbm %s1, %s281
          %s284 = sshll.u32 %s275, 4
          %s285 = int_to_ptr.vmem [resolvable:$true] %s284
          %287 = dma.hbm_to_vmem [thread:$0]  %s282, 128, %s285, %s272
        $region24: #{tpu_custom_call.1} parent=15 // pred_fallthru
          _
      $region16: #{tpu_custom_call.1} parent=5 // pred_fallthru
        _
      %p288 = scmp.le.s32.totalorder 1, %s27
      %p289 = scmp.lt.s32.totalorder %s27, 3
      %p290 = pnand %p288, %p289
      %p291 = pneg %p290
      // Predicated region
      $region25: #{tpu_custom_call.1} parent=5 // pred_check
        _
      $region26: #{tpu_custom_call.1} parent=5 // pred_check_branch
        %293 = sbr.rel (%p290) target = $region28
      $region27: #{tpu_custom_call.1} parent=5 // pred_region
        %s294 = ssub.s32 %s27, 1
        %s295 = sand.u32 %s63, 1
        %s296 = scalar_lea.sflag [#allocation7], %s295
        %s297 = sand.u32 %s63, 1
        %s298 = smul.addr %s297, 16
        %s299 = scalar_lea.vmem [#allocation6], %s298
        // Predicated region
        $region29: #{tpu_custom_call.1} parent=27 // pred_check
          %p300 = pneg %p76
        $region30: #{tpu_custom_call.1} parent=27 // pred_check_branch
          %302 = sbr.rel (%p300) target = $region32
        $region31: #{tpu_custom_call.1} parent=27 // pred_region
          %303 = dma.done %s296, 256
        $region32: #{tpu_custom_call.1} parent=27 // pred_fallthru
          _
        %s304 = sand.u32 %s93, 1
        %s305 = scalar_lea.sflag [#allocation10], %s304
        %s306 = sand.u32 %s93, 1
        %s307 = smul.addr %s306, 8
        %s308 = scalar_lea.vmem [#allocation9], %s307
        // Predicated region
        $region33: #{tpu_custom_call.1} parent=27 // pred_check
          %p309 = pneg %p106
        $region34: #{tpu_custom_call.1} parent=27 // pred_check_branch
          %311 = sbr.rel (%p309) target = $region36
        $region35: #{tpu_custom_call.1} parent=27 // pred_region
          %312 = dma.done %s305, 128
        $region36: #{tpu_custom_call.1} parent=27 // pred_fallthru
          _
        %s313 = sand.u32 %s63, 1
        %s314 = scalar_lea.sflag [#allocation7], %s313
        %s315 = sand.u32 %s63, 1
        %s316 = smul.addr %s315, 16
        %s317 = scalar_lea.vmem [#allocation6], %s316
        %p318 = pneg %p76
        %p319 = pneg %p73
        %s320 = sand.u32 %s93, 1
        %s321 = scalar_lea.sflag [#allocation10], %s320
        %s322 = sand.u32 %s93, 1
        %s323 = smul.addr %s322, 8
        %s324 = scalar_lea.vmem [#allocation9], %s323
        %p325 = pneg %p106
        %p326 = pneg %p103
        %p327 = pneg %p136
        %p328 = pneg %p133
        %s329 = sand.u32 %s123, 1
        %s330 = scalar_lea.sflag [#allocation8], %s329
        %s331 = sand.u32 %s123, 1
        %s332 = scalar_lea.vmem [#allocation11], %s331
        %p333 = pneg %p166
        %p334 = pneg %p163
        %s335 = sand.u32 %s32, 1
        %s336 = scalar_lea.sflag [#allocation13], %s335
        %s337 = sand.u32 %s153, 1
        %s338 = smul.addr %s337, 2
        %s339 = scalar_lea.vmem [#allocation12], %s338
        %p340 = pneg %p196
        %p341 = pneg %p193
        %s342 = sand.u32 %s32, 1
        %s343 = scalar_lea.sflag [#allocation13], %s342
        %s344 = sand.u32 %s183, 1
        %s345 = smul.addr %s344, 2
        %s346 = scalar_lea.vmem [#allocation14], %s345
        %p347 = pneg %p226
        %p348 = pneg %p223
        %s349 = sand.u32 %s213, 1
        %s350 = scalar_lea.sflag [#allocation16], %s349
        %s351 = sand.u32 %s213, 1
        %s352 = smul.addr %s351, 2
        %s353 = scalar_lea.vmem [#allocation15], %s352
        %s354 = sadd.s32 %s37, %s39
        %s355 = sadd.s32 %s37, %s39
        %s356 = smul.u32 %s37, 2
        %s357 = sadd.s32 %s356, %s38
        %s358 = smul.u32 %s37, 2
        %s359 = sadd.s32 %s358, %s38
        %s360 = smul.u32 %s37, 2
        %s361 = sadd.s32 %s360, %s38
        %s362 = smul.u32 %s37, 2
        %s363 = sadd.s32 %s362, %s38
        %p364 = scmp.eq.s32.totalorder %s39, 0
        // Predicated region
        $region37: #{tpu_custom_call.1} parent=27 // pred_check
          %p365 = pneg %p364
        $region38: #{tpu_custom_call.1} parent=27 // pred_check_branch
          %367 = sbr.rel (%p365) target = $region40
        $region39: #{tpu_custom_call.1} parent=27 // pred_region
          %368 = vst [vmem:[#allocation2] sm:$0x1] 0.0
          %369 = vst [vmem:[#allocation3] sm:$0x1] 0.0
          %370 = vst [vmem:[#allocation3 + $0x1] sm:$0x1] 0.0
          %371 = vst [vmem:[#allocation4] sm:$0x1] 0.0
          %372 = vst [vmem:[#allocation4 + $0x1] sm:$0x1] 0.0
          %373 = vst [vmem:[#allocation5] sm:$0x1] 0.0
          %374 = vst [vmem:[#allocation5 + $0x1] sm:$0x1] 0.0
        $region40: #{tpu_custom_call.1} parent=27 // pred_fallthru
          _
        %v375 = vld [vmem:[%s308] sm:$0xff]
        %v376 = vcvt.f32.s32.to.zero.pseudo %v375
        %v377 = vld [vmem:[%s299] sm:$0xff]
        %s378 = scalar_lea.vmem %s299, 8 [#allocation6]
        %v379 = vld [vmem:[%s378] sm:$0xff]
        %v380 = vmax.f32 %v377, %v379
        %v381 = vsub.f32 %v377, %v380
        %v382 = vmul.f32 %v381, 1.442695
        %v383 = vpow.pop %v382
        %v384 = vsub.f32 %v379, %v380
        %v385 = vmul.f32 %v384, 1.442695
        %v386 = vpow.pop %v385
        %v387 = vadd.f32 %v383, %v386
        %v388 = vrcp.pop %v387
        %v389 = vmul.f32 %v383, %v388
        %v390 = vmul.f32 %v386, %v388
        %v391 = vlog2.pop %v387
        %v392 = vmul.f32 %v391, 0.6931472
        %v393 = vadd.f32 %v380, %v392
        %vm394 = vcmp.eq.s32.totalorder %v376, 0
        %v395 = vsel %vm394, 1, 0
        %v396 = vcvt.s32.f32 %v395
        %v397 = vmul.f32 %v377, %v396
        %v398 = vadd.f32 %v397, 0.0
        %v399 = vld [vmem:[#allocation3] sm:$0x1]
        %v400 = vmul.f32 %v389, %v396
        %v401 = vrot.slane %v400, 4
        %v402 = vadd.f32 %v400, %v401
        %v403 = vrot.slane %v402, 2
        %v404 = vadd.f32 %v402, %v403
        %v405 = vrot.slane %v404, 1
        %v406 = vadd.f32 %v404, %v405
        %v407 = vadd.f32 %v399, %v406
        %408 = vst [vmem:[#allocation3] sm:$0x1] %v407
        %v409 = vld [vmem:[#allocation4] sm:$0x1]
        %v410 = vmul.f32 %v389, %v389
        %v411 = vrot.slane %v410, 4
        %v412 = vadd.f32 %v410, %v411
        %v413 = vrot.slane %v412, 2
        %v414 = vadd.f32 %v412, %v413
        %v415 = vrot.slane %v414, 1
        %v416 = vadd.f32 %v414, %v415
        %v417 = vadd.f32 %v409, %v416
        %418 = vst [vmem:[#allocation4] sm:$0x1] %v417
        %v419 = vld [vmem:[#allocation5] sm:$0x1]
        %v420 = vrot.slane %v396, 4
        %v421 = vadd.f32 %v396, %v420
        %v422 = vrot.slane %v421, 2
        %v423 = vadd.f32 %v421, %v422
        %v424 = vrot.slane %v423, 1
        %v425 = vadd.f32 %v423, %v424
        %v426 = vadd.f32 %v419, %v425
        %427 = vst [vmem:[#allocation5] sm:$0x1] %v426
        %vm428 = vcmp.eq.s32.totalorder %v376, 1
        %v429 = vsel %vm428, 1, 0
        %v430 = vcvt.s32.f32 %v429
        %v431 = vmul.f32 %v379, %v430
        %v432 = vadd.f32 %v398, %v431
        %s433 = scalar_lea.vmem [#allocation3], 1
        %v434 = vld [vmem:[%s433] sm:$0x1]
        %v435 = vmul.f32 %v390, %v430
        %v436 = vrot.slane %v435, 4
        %v437 = vadd.f32 %v435, %v436
        %v438 = vrot.slane %v437, 2
        %v439 = vadd.f32 %v437, %v438
        %v440 = vrot.slane %v439, 1
        %v441 = vadd.f32 %v439, %v440
        %v442 = vadd.f32 %v434, %v441
        %443 = vst [vmem:[%s433] sm:$0x1] %v442
        %s444 = scalar_lea.vmem [#allocation4], 1
        %v445 = vld [vmem:[%s444] sm:$0x1]
        %v446 = vmul.f32 %v390, %v390
        %v447 = vrot.slane %v446, 4
        %v448 = vadd.f32 %v446, %v447
        %v449 = vrot.slane %v448, 2
        %v450 = vadd.f32 %v448, %v449
        %v451 = vrot.slane %v450, 1
        %v452 = vadd.f32 %v450, %v451
        %v453 = vadd.f32 %v445, %v452
        %454 = vst [vmem:[%s444] sm:$0x1] %v453
        %s455 = scalar_lea.vmem [#allocation5], 1
        %v456 = vld [vmem:[%s455] sm:$0x1]
        %v457 = vrot.slane %v430, 4
        %v458 = vadd.f32 %v430, %v457
        %v459 = vrot.slane %v458, 2
        %v460 = vadd.f32 %v458, %v459
        %v461 = vrot.slane %v460, 1
        %v462 = vadd.f32 %v460, %v461
        %v463 = vadd.f32 %v456, %v462
        %464 = vst [vmem:[%s455] sm:$0x1] %v463
        %v465 = vld [vmem:[#allocation2] sm:$0x1]
        %v466 = vsub.f32 %v393, %v432
        %v467 = vrot.slane %v466, 4
        %v468 = vadd.f32 %v466, %v467
        %v469 = vrot.slane %v468, 2
        %v470 = vadd.f32 %v468, %v469
        %v471 = vrot.slane %v470, 1
        %v472 = vadd.f32 %v470, %v471
        %v473 = vadd.f32 %v465, %v472
        %474 = vst [vmem:[#allocation2] sm:$0x1] %v473
        // Predicated region
        $region41: #{tpu_custom_call.1} parent=27 // pred_check
          %p475 = pneg %p364
        $region42: #{tpu_custom_call.1} parent=27 // pred_check_branch
          %477 = sbr.rel (%p475) target = $region44
        $region43: #{tpu_custom_call.1} parent=27 // pred_region
          %v478 = vld [vmem:[#allocation2] sm:$0x1]
          %479 = vst [vmem:[%s332] sm:$0x1] %v478
          %v480 = vld [vmem:[#allocation3] sm:$0x1]
          %v481 = vld [vmem:[#allocation3 + $0x1] sm:$0x1]
          %482 = vst [vmem:[%s339] sm:$0x1] %v480
          %483 = vst [vmem:[%s339 + $0x1] sm:$0x1] %v481
          %v484 = vld [vmem:[#allocation4] sm:$0x1]
          %v485 = vld [vmem:[#allocation4 + $0x1] sm:$0x1]
          %486 = vst [vmem:[%s346] sm:$0x1] %v484
          %487 = vst [vmem:[%s346 + $0x1] sm:$0x1] %v485
          %v488 = vld [vmem:[#allocation5] sm:$0x1]
          %v489 = vld [vmem:[#allocation5 + $0x1] sm:$0x1]
          %490 = vst [vmem:[%s353] sm:$0x1] %v488
          %491 = vst [vmem:[%s353 + $0x1] sm:$0x1] %v489
        $region44: #{tpu_custom_call.1} parent=27 // pred_fallthru
          _
        %s492 = sand.u32 %s123, 1
        %s493 = scalar_lea.sflag [#allocation8], %s492
        %s494 = sand.u32 %s123, 1
        %s495 = scalar_lea.vmem [#allocation11], %s494
        %s496 = sand.u32 %s32, 1
        %s497 = scalar_lea.sflag [#allocation13], %s496
        %s498 = sand.u32 %s153, 1
        %s499 = smul.addr %s498, 2
        %s500 = scalar_lea.vmem [#allocation12], %s499
        %s501 = sand.u32 %s32, 1
        %s502 = scalar_lea.sflag [#allocation13], %s501
        %s503 = sand.u32 %s183, 1
        %s504 = smul.addr %s503, 2
        %s505 = scalar_lea.vmem [#allocation14], %s504
        %s506 = sand.u32 %s213, 1
        %s507 = scalar_lea.sflag [#allocation16], %s506
        %s508 = sand.u32 %s213, 1
        %s509 = smul.addr %s508, 2
        %s510 = scalar_lea.vmem [#allocation15], %s509
        // Predicated region
        $region45: #{tpu_custom_call.1} parent=27 // pred_check
          %p511 = pneg %p133
        $region46: #{tpu_custom_call.1} parent=27 // pred_check_branch
          %513 = sbr.rel (%p511) target = $region48
        $region47: #{tpu_custom_call.1} parent=27 // pred_region
          %s514 = smul.u32 %s37, 2
          %s515 = sadd.s32 %s514, %s38
          %s517 = ssub.s32 16, 16
          %518 = vsyncadd %s493, %s517
          %s519 = smul.addr %s515, 16
          %s520 = scalar_lea.hbm %s2, %s519
          %s522 = sshll.u32 %s495, 4
          %s523 = int_to_ptr.vmem [resolvable:$true] %s522
          %525 = dma.vmem_to_hbm [thread:$0]  %s523, 16, %s520, %s493
        $region48: #{tpu_custom_call.1} parent=27 // pred_fallthru
          _
        // Predicated region
        $region49: #{tpu_custom_call.1} parent=27 // pred_check
          %p526 = pneg %p163
        $region50: #{tpu_custom_call.1} parent=27 // pred_check_branch
          %528 = sbr.rel (%p526) target = $region52
        $region51: #{tpu_custom_call.1} parent=27 // pred_region
          %s529 = smul.u32 %s37, 2
          %s530 = sadd.s32 %s529, %s38
          %s532 = ssub.s32 32, 32
          %533 = vsyncadd %s497, %s532
          %s534 = smul.addr %s530, 2
          %s535 = smul.addr %s534, 16
          %s536 = scalar_lea.hbm %s3, %s535
          %s537 = sshll.u32 %s500, 4
          %s538 = int_to_ptr.vmem [resolvable:$true] %s537
          %543 = dma.vmem_to_hbm [thread:$0]  %s538, 32, %s536, %s497, 16, 16, 1
        $region52: #{tpu_custom_call.1} parent=27 // pred_fallthru
          _
        // Predicated region
        $region53: #{tpu_custom_call.1} parent=27 // pred_check
          %p544 = pneg %p193
        $region54: #{tpu_custom_call.1} parent=27 // pred_check_branch
          %546 = sbr.rel (%p544) target = $region56
        $region55: #{tpu_custom_call.1} parent=27 // pred_region
          %s547 = smul.u32 %s37, 2
          %s548 = sadd.s32 %s547, %s38
          %s550 = ssub.s32 32, 32
          %551 = vsyncadd %s502, %s550
          %s552 = smul.addr %s548, 2
          %s553 = smul.addr %s552, 16
          %s554 = scalar_lea.hbm %s4, %s553
          %s555 = sshll.u32 %s505, 4
          %s556 = int_to_ptr.vmem [resolvable:$true] %s555
          %561 = dma.vmem_to_hbm [thread:$0]  %s556, 32, %s554, %s502, 16, 16, 1
        $region56: #{tpu_custom_call.1} parent=27 // pred_fallthru
          _
        // Predicated region
        $region57: #{tpu_custom_call.1} parent=27 // pred_check
          %p562 = pneg %p223
        $region58: #{tpu_custom_call.1} parent=27 // pred_check_branch
          %564 = sbr.rel (%p562) target = $region60
        $region59: #{tpu_custom_call.1} parent=27 // pred_region
          %s565 = smul.u32 %s37, 2
          %s566 = sadd.s32 %s565, %s38
          %s568 = ssub.s32 32, 32
          %569 = vsyncadd %s507, %s568
          %s570 = smul.addr %s566, 2
          %s571 = smul.addr %s570, 16
          %s572 = scalar_lea.hbm %s5, %s571
          %s573 = sshll.u32 %s510, 4
          %s574 = int_to_ptr.vmem [resolvable:$true] %s573
          %579 = dma.vmem_to_hbm [thread:$0]  %s574, 32, %s572, %s507, 16, 16, 1
        $region60: #{tpu_custom_call.1} parent=27 // pred_fallthru
          _
      $region28: #{tpu_custom_call.1} parent=5 // pred_fallthru
        _
      %p580 = scmp.le.s32.totalorder 2, %s27
      // Predicated region
      $region61: #{tpu_custom_call.1} parent=5 // pred_check
        %p581 = pneg %p580
      $region62: #{tpu_custom_call.1} parent=5 // pred_check_branch
        %583 = sbr.rel (%p581) target = $region64
      $region63: #{tpu_custom_call.1} parent=5 // pred_region
        %s584 = ssub.s32 %s27, 2
        // Predicated region
        $region65: #{tpu_custom_call.1} parent=63 // pred_check
          %p585 = pneg %p139
        $region66: #{tpu_custom_call.1} parent=63 // pred_check_branch
          %587 = sbr.rel (%p585) target = $region68
        $region67: #{tpu_custom_call.1} parent=63 // pred_region
          %s588 = sand.u32 %s124, 1
          %s589 = scalar_lea.sflag [#allocation8], %s588
          %s590 = sand.u32 %s124, 1
          %s591 = scalar_lea.vmem [#allocation11], %s590
          %592 = dma.done %s589, 16
        $region68: #{tpu_custom_call.1} parent=63 // pred_fallthru
          _
        // Predicated region
        $region69: #{tpu_custom_call.1} parent=63 // pred_check
          %p593 = pneg %p169
        $region70: #{tpu_custom_call.1} parent=63 // pred_check_branch
          %595 = sbr.rel (%p593) target = $region72
        $region71: #{tpu_custom_call.1} parent=63 // pred_region
          %s596 = sand.u32 %s33, 1
          %s597 = scalar_lea.sflag [#allocation13], %s596
          %s598 = sand.u32 %s154, 1
          %s599 = smul.addr %s598, 2
          %s600 = scalar_lea.vmem [#allocation12], %s599
          %601 = dma.done %s597, 32
        $region72: #{tpu_custom_call.1} parent=63 // pred_fallthru
          _
        // Predicated region
        $region73: #{tpu_custom_call.1} parent=63 // pred_check
          %p602 = pneg %p199
        $region74: #{tpu_custom_call.1} parent=63 // pred_check_branch
          %604 = sbr.rel (%p602) target = $region76
        $region75: #{tpu_custom_call.1} parent=63 // pred_region
          %s605 = sand.u32 %s33, 1
          %s606 = scalar_lea.sflag [#allocation13], %s605
          %s607 = sand.u32 %s184, 1
          %s608 = smul.addr %s607, 2
          %s609 = scalar_lea.vmem [#allocation14], %s608
          %610 = dma.done %s606, 32
        $region76: #{tpu_custom_call.1} parent=63 // pred_fallthru
          _
        // Predicated region
        $region77: #{tpu_custom_call.1} parent=63 // pred_check
          %p611 = pneg %p229
        $region78: #{tpu_custom_call.1} parent=63 // pred_check_branch
          %613 = sbr.rel (%p611) target = $region80
        $region79: #{tpu_custom_call.1} parent=63 // pred_region
          %s614 = sand.u32 %s214, 1
          %s615 = scalar_lea.sflag [#allocation16], %s614
          %s616 = sand.u32 %s214, 1
          %s617 = smul.addr %s616, 2
          %s618 = scalar_lea.vmem [#allocation15], %s617
          %619 = dma.done %s615, 32
        $region80: #{tpu_custom_call.1} parent=63 // pred_fallthru
          _
      $region64: #{tpu_custom_call.1} parent=5 // pred_fallthru
        _
    $region6: #{tpu_custom_call.1} parent=1 // loop_footer
      %s31 = sadd.s32 1, %s27
    $region7: #{tpu_custom_call.1} parent=1 // loop_footer_branch
      %26 = sbr.rel target = $region3
    $region8: #{tpu_custom_call.1} parent=1 // loop_exit
      _
    %620 = vsyncpa [#allocation7], 1
    %s621 = scalar_lea.sflag [#allocation7], 1
    %622 = vsyncpa %s621, 1
    %623 = vsyncpa [#allocation10], 1
    %s624 = scalar_lea.sflag [#allocation10], 1
    %625 = vsyncpa %s624, 1
    %626 = vsyncpa [#allocation8], 1
    %s627 = scalar_lea.sflag [#allocation8], 1
    %628 = vsyncpa %s627, 1
    %629 = vsyncpa [#allocation13], 1
    %s630 = scalar_lea.sflag [#allocation13], 1
    %631 = vsyncpa %s630, 1
    %632 = vsyncpa [#allocation16], 1
    %s633 = scalar_lea.sflag [#allocation16], 1
    %634 = vsyncpa %s633, 1

</llo_original>
